<compile_context>
chip_gen: v7x
topology: tpu7x:2x2x1
jax: 0.10.0
libtpu: 0.0.40
codegen_flags: <defaults>
</compile_context>

<pallas_src>
import functools

import numpy as np
import jax
import jax.numpy as jnp
from jax.experimental import pallas as pl
from jax.experimental.pallas import tpu as pltpu


# ---------------------------------------------------------------------------
# Kernel 1: K-axis reduction over all nodes at once (hoisted out of the gather).
#   x_flat: (K, P) lane-dense tiles -> out: (1, P)
# ---------------------------------------------------------------------------
def _ksum_kernel(x_ref, o_ref):
    o_ref[...] = jnp.sum(x_ref[...], axis=0, keepdims=True)


# ---------------------------------------------------------------------------
# Kernel 2: batched edge gather from the VMEM-resident per-node covariance sums.
#   sig_ref : (N, d*d)  (loaded once; constant index_map)
#   out_ref : (BE, 2*d*d) -- [:, :dd] = sig_sum[row[e]], [:, dd:] = sig_sum[col[e]]
# Row/col edge indices arrive via scalar prefetch (SMEM).
# ---------------------------------------------------------------------------
def _gather_kernel(row_ref, col_ref, sig_ref, out_ref, *, be, dd):
    e0 = pl.program_id(0) * be

    def body(i, carry):
        r = row_ref[e0 + i]
        c = col_ref[e0 + i]
        out_ref[pl.ds(i, 1), pl.ds(0, dd)] = sig_ref[pl.ds(r, 1), :]
        out_ref[pl.ds(i, 1), pl.ds(dd, dd)] = sig_ref[pl.ds(c, 1), :]
        return carry

    jax.lax.fori_loop(0, be, body, 0)


# ---------------------------------------------------------------------------
# Kernel 3: GW map construction, edges in lanes.
#   ls_ref/lt_ref : (d,   BE)   eigenvalues (ascending, paired sorted)
#   us_ref/ut_ref : (d*d, BE)   row index = i*d + j  (U[e, i, j])
#   a_ref         : (d*d, BE)   row index = i*d + k  (A[e, i, k])
#   A[e,i,k] = sum_j U_s[e,i,j] * sqrt(max(lam_t,0))*rsqrt(max(lam_s,eps)) * U_t[e,k,j]
# The bias b = mu_t - mu_s @ A of the reference is computed-and-discarded in the
# PyTorch forward, so it is not emitted here.
# ---------------------------------------------------------------------------
def _gw_maps_kernel(ls_ref, lt_ref, us_ref, ut_ref, a_ref, *, d):
    eps = 1e-12
    # rsqrt lowers to the EUP slot, leaving VALU slots for the multiply/adds.
    scale = jnp.sqrt(jnp.maximum(lt_ref[...], 0.0)) * jax.lax.rsqrt(
        jnp.maximum(ls_ref[...], eps))                       # (d, BE)
    us = us_ref[...]                                         # (d*d, BE)
    ut = ut_ref[...]                                         # (d*d, BE)
    sc = [scale[j:j + 1, :] for j in range(d)]               # hoist slices
    usr = [us[r:r + 1, :] for r in range(d * d)]
    utr = [ut[r:r + 1, :] for r in range(d * d)]
    for i in range(d):
        for k in range(d):
            acc = usr[i * d] * sc[0] * utr[k * d]
            for j in range(1, d):
                acc = acc + usr[i * d + j] * sc[j] * utr[k * d + j]
            a_ref[i * d + k:i * d + k + 1, :] = acc          # (1, BE) lane-dense


def _init_mlp_params(key, d, mlp_num_layers, mlp_hidden_channels, out_dim):
    """Deterministic init matching the nn.Linear shapes in __init__.
    The MLP is never called in forward (dead code); kept only for fidelity."""
    sizes = [d * d + d] + [mlp_hidden_channels] * mlp_num_layers + [out_dim]
    params = []
    for fan_in, fan_out in zip(sizes[:-1], sizes[1:]):
        key, kw, kb = jax.random.split(key, 3)
        bound = 1.0 / float(np.sqrt(fan_in))
        w = jax.random.uniform(kw, (fan_out, fan_in), jnp.float32, -bound, bound)
        b = jax.random.uniform(kb, (fan_out,), jnp.float32, -bound, bound)
        params.append((w, b))
    return params


def opt_maps_sheaf_learner_forward(x, edge_index, *, d, out_shape, edge_block=512):
    x_mu, x_sig = x
    del x_mu  # only feeds the bias that the reference forward discards
    row = edge_index[0].astype(jnp.int32)
    col = edge_index[1].astype(jnp.int32)
    K, N = x_sig.shape[0], x_sig.shape[1]
    E = row.shape[0]
    dd = d * d

    # ---------------- Kernel 1: sig_sum = x_sig.sum(dim=0) over all nodes ------
    TC = 512
    P_raw = N * dd
    P = ((P_raw + TC - 1) // TC) * TC
    x_flat = x_sig.reshape(K, P_raw).astype(jnp.float32)
    if P != P_raw:
        x_flat = jnp.pad(x_flat, ((0, 0), (0, P - P_raw)))
    sig_sum_flat = pl.pallas_call(
        _ksum_kernel,
        grid=(P // TC,),
        in_specs=[pl.BlockSpec((K, TC), lambda i: (0, i))],
        out_specs=pl.BlockSpec((1, TC), lambda i: (0, i)),
        out_shape=jax.ShapeDtypeStruct((1, P), jnp.float32),
        compiler_params=pltpu.CompilerParams(dimension_semantics=("parallel",)),
    )(x_flat)
    sig_sum = sig_sum_flat[0, :P_raw].reshape(N, dd)          # (N, d*d)

    # ---------------- Kernel 2: batched edge gather ----------------------------
    # BE edges per grid step; pad E so both edge kernels see full blocks and the
    # output last dim covers full contiguous rows (single contiguous writeback).
    BE = max(128, ((min(edge_block, max(E, 1)) + 127) // 128) * 128)
    E_pad = ((E + BE - 1) // BE) * BE
    row_p = jnp.pad(row, (0, E_pad - E))                      # pad with node 0
    col_p = jnp.pad(col, (0, E_pad - E))

    # NOTE: sig_sum (N*d*d*4 bytes) stays VMEM-resident for the whole gather; at
    # production N size this against the 32 MiB scoped / 64 MiB (v7x) budget.
    gathered = pl.pallas_call(
        functools.partial(_gather_kernel, be=BE, dd=dd),
        grid_spec=pltpu.PrefetchScalarGridSpec(
            num_scalar_prefetch=2,
            grid=(E_pad // BE,),
            in_specs=[pl.BlockSpec((N, dd), lambda e, row, col: (0, 0))],
            out_specs=pl.BlockSpec((BE, 2 * dd), lambda e, row, col: (e, 0)),
        ),
        out_shape=jax.ShapeDtypeStruct((E_pad, 2 * dd), jnp.float32),
        compiler_params=pltpu.CompilerParams(dimension_semantics=("parallel",)),
    )(row_p, col_p, sig_sum)

    # ---------------- eigh (XLA) between the kernels ---------------------------
    # Single batched eigh over both source and target covariances.
    sig_pair = gathered.reshape(E_pad, 2, d, d)               # [:,0]=row, [:,1]=col
    lam, u = jnp.linalg.eigh(sig_pair)                        # ascending eigenvalues
    # Sorted-eigenvalue pairing matches POT for equal dims; for degenerate
    # spectra the eigenvector basis is arbitrary (GW property still holds).

    # plain-JAX glue: edges-in-lanes layout for the GW-map kernel.
    ls = jnp.transpose(lam[:, 0, :])                          # (d,   E_pad)
    lt = jnp.transpose(lam[:, 1, :])                          # (d,   E_pad)
    us = jnp.transpose(u[:, 0].reshape(E_pad, dd))            # (d*d, E_pad) row=i*d+j
    ut = jnp.transpose(u[:, 1].reshape(E_pad, dd))            # (d*d, E_pad) row=k*d+j

    # ---------------- Kernel 3: GW maps, edges in lanes ------------------------
    a2 = pl.pallas_call(
        functools.partial(_gw_maps_kernel, d=d),
        grid=(E_pad // BE,),
        in_specs=[
            pl.BlockSpec((d, BE), lambda i: (0, i)),
            pl.BlockSpec((d, BE), lambda i: (0, i)),
            pl.BlockSpec((dd, BE), lambda i: (0, i)),
            pl.BlockSpec((dd, BE), lambda i: (0, i)),
        ],
        out_specs=pl.BlockSpec((dd, BE), lambda i: (0, i)),
        out_shape=jax.ShapeDtypeStruct((dd, E_pad), jnp.float32),
        compiler_params=pltpu.CompilerParams(dimension_semantics=("parallel",)),
    )(ls, lt, us, ut)

    opt_maps = jnp.transpose(a2)[:E]                          # (E, d*d), row-major A[e]
    if len(out_shape) == 2:
        return opt_maps.reshape(-1, out_shape[0], out_shape[1])
    return opt_maps.reshape(-1, out_shape[0])


if __name__ == "__main__":
    key = jax.random.PRNGKey(0)
    d = 4            # stalk dimension
    K = 2            # leading axis the forward sums over (dim=0)
    N = 8            # number of nodes
    E = 8            # number of edges
    out_shape = (d, d)
    hidden_channels = 32        # unused in forward (kept for __init__ fidelity)
    rest_maps_mlp = (2, 32)     # (mlp_num_layers, mlp_hidden_channels)

    k_mu, k_sig, k_row, k_col, k_mlp = jax.random.split(key, 5)
    x_mu = jax.random.normal(k_mu, (K, N, d), dtype=jnp.float32)
    m = jax.random.normal(k_sig, (K, N, d, d), dtype=jnp.float32)
    # symmetric positive-definite per-node covariances so eigvals are well-behaved
    x_sig = jnp.matmul(m, jnp.swapaxes(m, -1, -2)) + 0.5 * jnp.eye(d, dtype=jnp.float32)
    row = jax.random.randint(k_row, (E,), 0, N, dtype=jnp.int32)
    col = jax.random.randint(k_col, (E,), 0, N, dtype=jnp.int32)
    edge_index = jnp.stack([row, col], axis=0)

    # Deterministic init of the module's parameters (MLP + act are dead code in
    # forward; instantiated only for shape fidelity with __init__).
    _mlp_params = _init_mlp_params(k_mlp, d, rest_maps_mlp[0], rest_maps_mlp[1],
                                   int(np.prod(out_shape)))
    _act = jnp.tanh  # sheaf_act='tanh'

    out = opt_maps_sheaf_learner_forward((x_mu, x_sig), edge_index,
                                         d=d, out_shape=out_shape)
    out = jax.block_until_ready(out)

    # ---- correctness checks against a plain-JAX reference ----------------------
    sig_sum_ref = x_sig.sum(axis=0)
    sig_row_ref = sig_sum_ref[row]
    sig_col_ref = sig_sum_ref[col]
    ls_r, us_r = jnp.linalg.eigh(sig_row_ref)
    lt_r, ut_r = jnp.linalg.eigh(sig_col_ref)
    scale_r = jnp.sqrt(jnp.maximum(lt_r, 0.0)) / jnp.sqrt(jnp.maximum(ls_r, 1e-12))
    a_ref = jnp.einsum('eij,ej,ekj->eik', us_r, scale_r, ut_r,
                       precision=jax.lax.Precision.HIGHEST)
    ref = np.asarray(a_ref).reshape((-1,) + tuple(out_shape))

    out_np = np.asarray(out)
    assert out_np.shape == (E,) + tuple(out_shape), out_np.shape
    np.testing.assert_allclose(out_np, ref, rtol=1e-2, atol=1e-2)

    # GW-map property (invariant to eigenvector sign choices): A^T Cov_s A == Cov_t
    a_mat = out_np.reshape(E, d, d)
    recon = np.einsum('eji,ejk,ekl->eil', a_mat, np.asarray(sig_row_ref), a_mat)
    np.testing.assert_allclose(recon, np.asarray(sig_col_ref), rtol=1e-2, atol=1e-2)

    print("KERNEL_OK")
</pallas_src>

<mosaic_0001>
module attributes {stable_mosaic.version = 11 : i64} {
  func.func @_ksum_kernel(%arg0: i32, %arg1: memref<2x512xf32, #tpu.memory_space<vmem>>, %arg2: memref<1x512xf32, #tpu.memory_space<vmem>>) attributes {dimension_semantics = [#tpu.dimension_semantics<parallel>], iteration_bounds = array<i64: 1>, scalar_prefetch = 0 : i64, scratch_operands = 0 : i64, tpu.core_type = #tpu.core_type<tc>, window_params = [{transform_indices = @transform_0, window_bounds = array<i64: 2, 512>}, {transform_indices = @transform_1, window_bounds = array<i64: 1, 512>}]} {
    %c0 = arith.constant 0 : index
    %c0_0 = arith.constant 0 : index
    %0 = vector.load %arg1[%c0, %c0_0] : memref<2x512xf32, #tpu.memory_space<vmem>>, vector<2x512xf32>
    %cst = arith.constant dense<0.000000e+00> : vector<512xf32>
    %1 = vector.multi_reduction <add>, %0, %cst [0] : vector<2x512xf32> to vector<512xf32>
    %2 = vector.shape_cast %1 : vector<512xf32> to vector<1x512xf32>
    %c0_1 = arith.constant 0 : index
    %c0_2 = arith.constant 0 : index
    %3 = vector.load %arg2[%c0_1, %c0_2] : memref<1x512xf32, #tpu.memory_space<vmem>>, vector<1x512xf32>
    tpu.vector_store %arg2[%c0_1, %c0_2], %2 {strides = array<i32>} : memref<1x512xf32, #tpu.memory_space<vmem>>, vector<1x512xf32>,
    return
  }
  func.func @transform_0(%arg0: i32) -> (i32, i32) {
    %c0_i32 = arith.constant 0 : i32
    %c0_i32_0 = arith.constant 0 : i32
    return %c0_i32, %arg0 : i32, i32
  }
  func.func @transform_1(%arg0: i32) -> (i32, i32) {
    %c0_i32 = arith.constant 0 : i32
    %c0_i32_0 = arith.constant 0 : i32
    return %c0_i32, %arg0 : i32, i32
  }
}

</mosaic_0001>

<llo_original>
// kernel: tpu_custom_call.1
$region0: #{tpu_custom_call.1}
  #allocation0 [shape = 'u32[]', space=smem, size = 0x4, offset = 0x4, fixed_abs, tag = 'smem constant byte address 0x4 - core index']
  #allocation1 [shape = 'u32[144,128]{1,0:T(1,128)}', space=vmem, size = 0x12000, scoped, tag = 'internal scratch']
  %s0 = inlined_call_operand.hbm [shape: f32[2,512], index: 0, kind: input, shape index: {}]
  %s1 = inlined_call_operand.hbm [shape: f32[1,512], index: 1, kind: output, shape index: {}]
  %s2 = sld [smem:[#allocation0]]
  $region18: #{tpu_custom_call.1} parent=0
    _
  %s4 = ssub.s32 1, %s2
  %s5 = scalar_select 0, %s4, %s2
  $region1: #{tpu_custom_call.1} parent=0
    #allocation2 [shape = 'u8[4096]{0}', space=vmem, size = 0x1000, scoped, tag = 'input window, operand 0, single buffered']
    #allocation3 [shape = 's32[1]{0}', space=sflag, size = 0x4, scoped, tag = 'scoped memory for tpu_custom_call.1']
    #allocation4 [shape = 's32[1]{0}', space=sflag, size = 0x4, scoped, tag = 'scoped memory for tpu_custom_call.1']
    #allocation5 [shape = 'u8[2048]{0}', space=vmem, size = 0x800, scoped, tag = 'output window, operand 0, single buffered']
    %6 = vsyncpa [#allocation3], 0
    %7 = vsyncpa [#allocation4], 0
    // Predicated region
    $region2: #{tpu_custom_call.1} parent=1 // pred_check
      _
    $region3: #{tpu_custom_call.1} parent=1 // pred_check_branch
      %9 = sbr.rel (0) target = $region5
    $region4: #{tpu_custom_call.1} parent=1 // pred_region
      %s11 = ssub.s32 128, 128
      %12 = vsyncadd [#allocation3], %s11
      %s14 = sshll.u32 [#allocation2], 4
      %s15 = int_to_ptr.vmem [resolvable:$true] %s14
      %17 = dma.hbm_to_vmem [thread:$0]  %s0, 128, %s15, [#allocation3]
    $region5: #{tpu_custom_call.1} parent=1 // pred_fallthru
      _
    // Predicated region
    $region6: #{tpu_custom_call.1} parent=1 // pred_check
      _
    $region7: #{tpu_custom_call.1} parent=1 // pred_check_branch
      %19 = sbr.rel (0) target = $region9
    $region8: #{tpu_custom_call.1} parent=1 // pred_region
      %20 = dma.done [#allocation3], 128
    $region9: #{tpu_custom_call.1} parent=1 // pred_fallthru
      _
    %v21 = vld [vmem:[#allocation2] sm:$0xff]
    %v23 = vcombine.high %v21, %v21
    %v25 = vunpack.c.l.s4 1983009808
    %v26 = vunpack.c.0.s8 %v25
    %v27 = vlaneseq
    %v28 = vshrl.u32 %v27, 7
    %v29 = vsub.s32 %v26, %v28
    %v30 = vrot.slane %v21, %v29
    %v32 = vunpack.c.l.s4 1983009808
    %v33 = vunpack.c.0.s8 %v32
    %v34 = vlaneseq
    %v35 = vshrl.u32 %v34, 7
    %v36 = vsub.s32 %v33, %v35
    %v37 = vrot.slane %v23, %v36
    %v38 = vcombine.high %v30, %v30
    %v39 = vcombine.high %v37, %v37
    %vm44 = vcmask 1041408
    %v45 = vsel %vm44, %v30, 0.0
    %v46 = vrot.slane %v45, 4
    %v47 = vadd.f32 %v45, %v46
    %v48 = vrot.slane %v47, 2
    %v49 = vadd.f32 %v47, %v48
    %v50 = vrot.slane %v49, 1
    %v51 = vadd.f32 %v49, %v50
    %v52 = vsel %vm44, %v38, 0.0
    %v53 = vrot.slane %v52, 4
    %v54 = vadd.f32 %v52, %v53
    %v55 = vrot.slane %v54, 2
    %v56 = vadd.f32 %v54, %v55
    %v57 = vrot.slane %v56, 1
    %v58 = vadd.f32 %v56, %v57
    %v59 = vsel %vm44, %v37, 0.0
    %v60 = vrot.slane %v59, 4
    %v61 = vadd.f32 %v59, %v60
    %v62 = vrot.slane %v61, 2
    %v63 = vadd.f32 %v61, %v62
    %v64 = vrot.slane %v63, 1
    %v65 = vadd.f32 %v63, %v64
    %v66 = vsel %vm44, %v39, 0.0
    %v67 = vrot.slane %v66, 4
    %v68 = vadd.f32 %v66, %v67
    %v69 = vrot.slane %v68, 2
    %v70 = vadd.f32 %v68, %v69
    %v71 = vrot.slane %v70, 1
    %v72 = vadd.f32 %v70, %v71
    %v77 = vcombine.low %v51, %v58
    %v78 = vcombine.low %v65, %v72
    %v80 = vunpack.c.l.s4 1966171168
    %v81 = vunpack.c.0.s8 %v80
    %v82 = vlaneseq
    %v83 = vshrl.u32 %v82, 7
    %v84 = vsub.s32 %v81, %v83
    %v85 = vrot.slane %v77, %v84
    %v87 = vunpack.c.l.s4 1966171168
    %v88 = vunpack.c.0.s8 %v87
    %v89 = vlaneseq
    %v90 = vshrl.u32 %v89, 7
    %v91 = vsub.s32 %v88, %v90
    %v92 = vrot.slane %v78, %v91
    %v93 = vcombine.low %v85, %v92
    %v95 = vunpack.c.l.s4 1966171168
    %v96 = vunpack.c.0.s8 %v95
    %v97 = vlaneseq
    %v98 = vshrl.u32 %v97, 7
    %v99 = vsub.s32 %v96, %v98
    %v100 = vrot.slane %v93, %v99
    %v102 = vlaneseq
    %vm103 = vcmp.ge.s32.totalorder %v102, 0
    %vm104 = vcmp.lt.s32.totalorder %v102, 512
    %vm105 = vmand %vm103, %vm104
    %106 = vst.msk [vmem:[#allocation5] sm:$0xf] %vm105, %v100
    // Predicated region
    $region10: #{tpu_custom_call.1} parent=1 // pred_check
      _
    $region11: #{tpu_custom_call.1} parent=1 // pred_check_branch
      %108 = sbr.rel (0) target = $region13
    $region12: #{tpu_custom_call.1} parent=1 // pred_region
      %s110 = ssub.s32 64, 64
      %111 = vsyncadd [#allocation4], %s110
      %s113 = sshll.u32 [#allocation5], 4
      %s114 = int_to_ptr.vmem [resolvable:$true] %s113
      %116 = dma.vmem_to_hbm [thread:$0]  %s114, 64, %s1, [#allocation4]
    $region13: #{tpu_custom_call.1} parent=1 // pred_fallthru
      _
    // Predicated region
    $region14: #{tpu_custom_call.1} parent=1 // pred_check
      _
    $region15: #{tpu_custom_call.1} parent=1 // pred_check_branch
      %118 = sbr.rel (0) target = $region17
    $region16: #{tpu_custom_call.1} parent=1 // pred_region
      %119 = dma.done [#allocation4], 64
    $region17: #{tpu_custom_call.1} parent=1 // pred_fallthru
      _
    %120 = vsyncpa [#allocation3], 1
    %121 = vsyncpa [#allocation4], 1

</llo_original>
